<compile_context>
chip_gen: v6e
topology: v6e:2x2x1
jax: 0.10.0
libtpu: 0.0.40
codegen_flags: <defaults>
</compile_context>

<pallas_src>
import functools
import math

import jax
import jax.numpy as jnp
from jax.experimental import pallas as pl
from jax.experimental.pallas import tpu as pltpu


def _bce_alpha_kernel(pred_ref, true_ref, out_ref, *, neg_inv_alpha, valid_rows):
    """One (block_rows, lane_width) tile of the fused BCE + modulating reduction."""
    p = pl.program_id(0)          # parallel axis (sharded across TensorCores)
    t = pl.program_id(1)          # reduction axis (output stays VMEM-resident)

    # Zero the per-parallel-index partial-sum block once.
    @pl.when(t == 0)
    def _():
        out_ref[...] = jnp.zeros_like(out_ref)

    br, lw = pred_ref.shape

    # Logical (unclamped) first row of this block.  The input index_map clamps
    # the DMA so it never starts past the array; here we mask the rows that the
    # clamp (or a ragged last block) made invalid.
    row_start = (p * pl.num_programs(1) + t) * br
    row_ids = row_start + jax.lax.broadcasted_iota(jnp.int32, (br, lw), 0)
    valid = row_ids < valid_rows

    x = pred_ref[...].astype(jnp.float32)
    y = true_ref[...].astype(jnp.float32)
    # Substitute inert inputs on invalid rows BEFORE any transcendental so
    # uninitialized VMEM garbage (possibly NaN/Inf) never reaches exp/log1p.
    x = jnp.where(valid, x, -40.0)
    y = jnp.where(valid, y, 0.0)

    # Shared transcendental: e = exp(-|x|)                          (EUP #1)
    e = jnp.exp(-jnp.abs(x))
    one_plus_e = 1.0 + e

    # Numerically stable BCE-with-logits (== torch.nn.BCEWithLogitsLoss):
    #   loss = max(x, 0) - x*y + log(1 + exp(-|x|))                 (EUP #2)
    loss = jnp.maximum(x, 0.0) - x * y + jnp.log1p(e)

    # sigmoid(x) = where(x >= 0, 1, e) / (1 + e); approx reciprocal (EUP #3)
    # plus one Newton-Raphson step (pure VPU).
    r = pl.reciprocal(one_plus_e, approx=True)
    r = r * (2.0 - one_plus_e * r)
    pred_prob = jnp.where(x >= 0.0, 1.0, e) * r

    # Alpha modulating factor; /alpha folded into a constant multiply.
    # TODO(synk): if the EUP slot binds on v7x/v6e with bf16 inputs, compute
    # this exp in bf16 (v6e/v7x EUP has a bf16 path); keep loss/log1p in f32.
    alpha_factor = jnp.abs(y - pred_prob)
    modulating = 1.0 - jnp.exp(alpha_factor * neg_inv_alpha)        # EUP #4
    loss = jnp.where(valid, loss * modulating, 0.0)

    # Collapse rows in groups of acc_rows (VPU adds only, no cross-lane work)
    # and accumulate into the resident (acc_rows, lw) output block.
    acc_rows = out_ref.shape[0]
    out_ref[...] += loss.reshape(br // acc_rows, acc_rows, lw).sum(axis=0)


def _tpu_defaults():
    """(num_parallel, vmem_limit_bytes) tuned per TPU generation."""
    kind = ""
    try:
        kind = jax.devices()[0].device_kind.lower()
    except Exception:
        pass
    if "v7" in kind or "7x" in kind:
        return 2, 48 * 1024 * 1024     # 2 TensorCores/chip, 64 MiB physical VMEM
    if "v4" in kind or "v5p" in kind:
        return 2, 64 * 1024 * 1024     # megacore (2 TCs), 128 MiB VMEM
    return 1, 64 * 1024 * 1024         # v5e / v6e: single TC, 128 MiB VMEM


def bce_with_logits_loss(pred, true, *, alpha=0.05, reduction="mean",
                         max_lane_width=2048, target_block_elems=None,
                         num_parallel=None, vmem_limit_bytes=None):
    """Pallas TPU implementation of BCEWithLogitsLoss(alpha) ('mean'/'sum')."""
    assert pred.shape == true.shape
    # TODO(synk): reduction='none' (elementwise output) not implemented; the
    # kernel fuses the reduction (the module's default is 'mean').
    if reduction not in ("mean", "sum"):
        raise NotImplementedError(f"reduction={reduction!r} not supported")

    total = math.prod(pred.shape)
    itemsize = jnp.dtype(pred.dtype).itemsize
    sub = 16 if itemsize < 4 else 8          # bf16 min tile is (16, 128)

    # ---- choose a lane-dense 2D view; avoid any padding/reshape copy ----
    if (pred.ndim == 2 and pred.shape[-1] % 128 == 0
            and pred.shape[-1] <= 65536):
        # Input is already a lane-dense slab: use it as-is (zero extra copies).
        rows, lw = pred.shape
        x2, y2 = pred, true
    else:
        # Flatten; pick the largest lane width (multiple of 128) that divides
        # the element count so the reshape needs no padding.
        lw = None
        fallback_lw = None
        cand = max_lane_width
        while cand >= 128:
            if total % cand == 0:
                if total // cand >= sub:
                    lw = cand
                    break
                if fallback_lw is None:
                    fallback_lw = cand
            cand -= 128
        pad = 0
        if lw is None:
            if fallback_lw is not None:
                lw = fallback_lw                 # divides `total`, few rows
            else:
                # total is not a multiple of 128: tiny (< lw) pad. This is the
                # only remaining case that pays a padding copy.
                lw = min(max_lane_width, 512)
                pad = (-total) % lw
        rows = (total + pad) // lw

        xf = jnp.ravel(pred)
        yf = jnp.ravel(true)
        if pad:
            # pred=-40, true=0  =>  modulating factor is exactly 0 in f32
            # (holds for any alpha >= ~1e-9), so padding contributes nothing.
            xf = jnp.concatenate([xf, jnp.full((pad,), -40.0, dtype=xf.dtype)])
            yf = jnp.concatenate([yf, jnp.zeros((pad,), dtype=yf.dtype)])
        x2 = xf.reshape(rows, lw)
        y2 = yf.reshape(rows, lw)

    # ---- block rows: ~4 MiB per input tile, multiple of `sub` sublanes ----
    if target_block_elems is None:
        target_block_elems = (4 * 1024 * 1024) // itemsize
    if rows < sub:
        br = rows                                # single block == full row extent
    else:
        br = max(sub, (target_block_elems // lw) // sub * sub)
        br = min(br, ((rows + sub - 1) // sub) * sub)
    acc_rows = 8 if br % 8 == 0 else br

    # ---- ragged grid: (parallel TCs) x (reduction steps); no row padding ----
    nrb = -(-rows // br)                         # number of real row blocks
    p_auto, vmem_auto = _tpu_defaults()
    P = num_parallel if num_parallel is not None else p_auto
    P = max(1, min(P, nrb))
    T = -(-nrb // P)
    vmem = vmem_limit_bytes if vmem_limit_bytes is not None else vmem_auto

    last_block = nrb - 1

    def in_map(p, t):
        # Clamp so the DMA never starts past the last real block; the kernel's
        # row mask zeroes any rows the clamp (or raggedness) made redundant.
        return (jnp.minimum(p * T + t, last_block), 0)

    def out_map(p, t):
        return (p, 0)

    kernel = functools.partial(
        _bce_alpha_kernel,
        neg_inv_alpha=-1.0 / float(alpha),
        valid_rows=rows,
    )

    cost = pl.CostEstimate(
        flops=14 * rows * lw,
        transcendentals=4 * rows * lw,
        bytes_accessed=2 * rows * lw * itemsize + P * acc_rows * lw * 4,
    )

    partials = pl.pallas_call(
        kernel,
        out_shape=jax.ShapeDtypeStruct((P * acc_rows, lw), jnp.float32),
        grid_spec=pltpu.PrefetchScalarGridSpec(
            num_scalar_prefetch=0,
            grid=(P, T),
            in_specs=[
                pl.BlockSpec((br, lw), in_map),
                pl.BlockSpec((br, lw), in_map),
            ],
            out_specs=pl.BlockSpec((acc_rows, lw), out_map),
        ),
        compiler_params=pltpu.CompilerParams(
            dimension_semantics=("parallel", "arbitrary"),
            vmem_limit_bytes=vmem,
        ),
        cost_estimate=cost,
    )(x2, y2)

    total_sum = jnp.sum(partials, dtype=jnp.float32)
    if reduction == "mean":
        return total_sum * (1.0 / total)
    return total_sum


def _reference(pred, true, alpha=0.05):
    x = pred.astype(jnp.float32)
    y = true.astype(jnp.float32)
    loss = jnp.maximum(x, 0.0) - x * y + jnp.log1p(jnp.exp(-jnp.abs(x)))
    p = jax.nn.sigmoid(x)
    mod = 1.0 - jnp.exp(-jnp.abs(y - p) / alpha)
    return jnp.mean(loss * mod)


if __name__ == "__main__":
    key = jax.random.PRNGKey(0)
    k1, k2, k3, k4 = jax.random.split(key, 4)

    # Case 1: the module's documented [B, N] shape (lane-dense fast path).
    B, N = 8, 256
    pred = jax.random.normal(k1, (B, N), dtype=jnp.float32) * 2.0
    true = (jax.random.uniform(k2, (B, N)) > 0.5).astype(jnp.float32)
    out = jax.block_until_ready(bce_with_logits_loss(pred, true, alpha=0.05))
    ref = _reference(pred, true, alpha=0.05)
    assert jnp.allclose(out, ref, rtol=2e-4, atol=1e-6), (out, ref)

    # Case 2: ragged shape exercising the flatten path + in-kernel row mask.
    B2, N2 = 40, 192
    pred2 = jax.random.normal(k3, (B2, N2), dtype=jnp.float32) * 3.0
    true2 = (jax.random.uniform(k4, (B2, N2)) > 0.5).astype(jnp.float32)
    out2 = jax.block_until_ready(bce_with_logits_loss(pred2, true2, alpha=0.05))
    ref2 = _reference(pred2, true2, alpha=0.05)
    assert jnp.allclose(out2, ref2, rtol=2e-4, atol=1e-6), (out2, ref2)

    print("KERNEL_OK")
</pallas_src>

<mosaic_0001>
module attributes {stable_mosaic.version = 11 : i64} {
  func.func @_bce_alpha_kernel(%arg0: i32, %arg1: i32, %arg2: memref<8x256xf32, #tpu.memory_space<vmem>>, %arg3: memref<8x256xf32, #tpu.memory_space<vmem>>, %arg4: memref<8x256xf32, #tpu.memory_space<vmem>>) attributes {dimension_semantics = [#tpu.dimension_semantics<parallel>, #tpu.dimension_semantics<arbitrary>], iteration_bounds = array<i64: 1, 1>, scalar_prefetch = 0 : i64, scratch_operands = 0 : i64, tpu.core_type = #tpu.core_type<tc>, window_params = [{transform_indices = @transform_0, window_bounds = array<i64: 8, 256>}, {transform_indices = @transform_1, window_bounds = array<i64: 8, 256>}, {transform_indices = @transform_2, window_bounds = array<i64: 8, 256>}]} {
    %c0_i32 = arith.constant 0 : i32
    %0 = arith.cmpi eq, %arg1, %c0_i32 : i32
    %1 = arith.extui %0 : i1 to i32
    %c0_i32_0 = arith.constant 0 : i32
    %2 = arith.cmpi ne, %1, %c0_i32_0 : i32
    scf.if %2 {
      %cst_20 = arith.constant 0.000000e+00 : f32
      %54 = vector.broadcast %cst_20 : f32 to vector<8x256xf32>
      %c0_21 = arith.constant 0 : index
      %c0_22 = arith.constant 0 : index
      %55 = vector.load %arg4[%c0_21, %c0_22] : memref<8x256xf32, #tpu.memory_space<vmem>>, vector<8x256xf32>
      tpu.vector_store %arg4[%c0_21, %c0_22], %54 {strides = array<i32>} : memref<8x256xf32, #tpu.memory_space<vmem>>, vector<8x256xf32>,
    } else {
    }
    %c1_i32 = arith.constant 1 : i32
    %3 = arith.muli %arg0, %c1_i32 : i32
    %4 = arith.addi %3, %arg1 : i32
    %c8_i32 = arith.constant 8 : i32
    %5 = arith.muli %4, %c8_i32 : i32
    %6 = tpu.iota {dimensions = array<i32: 0>} : vector<8x256xi32>
    %7 = vector.broadcast %5 : i32 to vector<8x256xi32>
    %8 = arith.addi %7, %6 : vector<8x256xi32>
    %c8_i32_1 = arith.constant 8 : i32
    %9 = vector.broadcast %c8_i32_1 : i32 to vector<8x256xi32>
    %10 = arith.cmpi slt, %8, %9 : vector<8x256xi32>
    %c0 = arith.constant 0 : index
    %c0_2 = arith.constant 0 : index
    %11 = vector.load %arg2[%c0, %c0_2] : memref<8x256xf32, #tpu.memory_space<vmem>>, vector<8x256xf32>
    %c0_3 = arith.constant 0 : index
    %c0_4 = arith.constant 0 : index
    %12 = vector.load %arg3[%c0_3, %c0_4] : memref<8x256xf32, #tpu.memory_space<vmem>>, vector<8x256xf32>
    %cst = arith.constant -4.000000e+01 : f32
    %13 = vector.broadcast %cst : f32 to vector<8x256xf32>
    %14 = arith.select %10, %11, %13 : vector<8x256xi1>, vector<8x256xf32>
    %cst_5 = arith.constant 0.000000e+00 : f32
    %15 = vector.broadcast %cst_5 : f32 to vector<8x256xf32>
    %16 = arith.select %10, %12, %15 : vector<8x256xi1>, vector<8x256xf32>
    %17 = math.absf %14 : vector<8x256xf32>
    %cst_6 = arith.constant 0.000000e+00 : f32
    %18 = vector.broadcast %cst_6 : f32 to vector<8x256xf32>
    %19 = arith.subf %18, %17 : vector<8x256xf32>
    %20 = math.exp %19 : vector<8x256xf32>
    %cst_7 = arith.constant 1.000000e+00 : f32
    %21 = vector.broadcast %cst_7 : f32 to vector<8x256xf32>
    %22 = arith.addf %21, %20 : vector<8x256xf32>
    %cst_8 = arith.constant 0.000000e+00 : f32
    %23 = vector.broadcast %cst_8 : f32 to vector<8x256xf32>
    %24 = arith.maximumf %14, %23 : vector<8x256xf32>
    %25 = arith.mulf %14, %16 : vector<8x256xf32>
    %26 = arith.subf %24, %25 : vector<8x256xf32>
    %27 = math.log1p %20 : vector<8x256xf32>
    %28 = arith.addf %26, %27 : vector<8x256xf32>
    %29 = tpu.reciprocal %22 {approx = true} : vector<8x256xf32> -> vector<8x256xf32>
    %30 = arith.mulf %22, %29 : vector<8x256xf32>
    %cst_9 = arith.constant 2.000000e+00 : f32
    %31 = vector.broadcast %cst_9 : f32 to vector<8x256xf32>
    %32 = arith.subf %31, %30 : vector<8x256xf32>
    %33 = arith.mulf %29, %32 : vector<8x256xf32>
    %cst_10 = arith.constant 0.000000e+00 : f32
    %34 = vector.broadcast %cst_10 : f32 to vector<8x256xf32>
    %35 = arith.cmpf oge, %14, %34 : vector<8x256xf32>
    %cst_11 = arith.constant 1.000000e+00 : f32
    %36 = vector.broadcast %cst_11 : f32 to vector<8x256xf32>
    %37 = arith.select %35, %36, %20 : vector<8x256xi1>, vector<8x256xf32>
    %38 = arith.mulf %37, %33 : vector<8x256xf32>
    %39 = arith.subf %16, %38 : vector<8x256xf32>
    %40 = math.absf %39 : vector<8x256xf32>
    %cst_12 = arith.constant -2.000000e+01 : f32
    %41 = vector.broadcast %cst_12 : f32 to vector<8x256xf32>
    %42 = arith.mulf %40, %41 : vector<8x256xf32>
    %43 = math.exp %42 : vector<8x256xf32>
    %cst_13 = arith.constant 1.000000e+00 : f32
    %44 = vector.broadcast %cst_13 : f32 to vector<8x256xf32>
    %45 = arith.subf %44, %43 : vector<8x256xf32>
    %46 = arith.mulf %28, %45 : vector<8x256xf32>
    %cst_14 = arith.constant 0.000000e+00 : f32
    %47 = vector.broadcast %cst_14 : f32 to vector<8x256xf32>
    %48 = arith.select %10, %46, %47 : vector<8x256xi1>, vector<8x256xf32>
    %c0_15 = arith.constant 0 : index
    %c0_16 = arith.constant 0 : index
    %49 = vector.load %arg4[%c0_15, %c0_16] : memref<8x256xf32, #tpu.memory_space<vmem>>, vector<8x256xf32>
    %50 = vector.shape_cast %48 : vector<8x256xf32> to vector<1x8x256xf32>
    %cst_17 = arith.constant dense<0.000000e+00> : vector<8x256xf32>
    %51 = vector.multi_reduction <add>, %50, %cst_17 [0] : vector<1x8x256xf32> to vector<8x256xf32>
    %52 = arith.addf %49, %51 : vector<8x256xf32>
    %c0_18 = arith.constant 0 : index
    %c0_19 = arith.constant 0 : index
    %53 = vector.load %arg4[%c0_18, %c0_19] : memref<8x256xf32, #tpu.memory_space<vmem>>, vector<8x256xf32>
    tpu.vector_store %arg4[%c0_18, %c0_19], %52 {strides = array<i32>} : memref<8x256xf32, #tpu.memory_space<vmem>>, vector<8x256xf32>,
    return
  }
  func.func @transform_0(%arg0: i32, %arg1: i32) -> (i32, i32) {
    %c1_i32 = arith.constant 1 : i32
    %0 = arith.muli %arg0, %c1_i32 : i32
    %1 = arith.addi %0, %arg1 : i32
    %c0_i32 = arith.constant 0 : i32
    %2 = arith.minsi %1, %c0_i32 : i32
    %c0_i32_0 = arith.constant 0 : i32
    %c0_i32_1 = arith.constant 0 : i32
    return %2, %c0_i32_0 : i32, i32
  }
  func.func @transform_1(%arg0: i32, %arg1: i32) -> (i32, i32) {
    %c1_i32 = arith.constant 1 : i32
    %0 = arith.muli %arg0, %c1_i32 : i32
    %1 = arith.addi %0, %arg1 : i32
    %c0_i32 = arith.constant 0 : i32
    %2 = arith.minsi %1, %c0_i32 : i32
    %c0_i32_0 = arith.constant 0 : i32
    %c0_i32_1 = arith.constant 0 : i32
    return %2, %c0_i32_0 : i32, i32
  }
  func.func @transform_2(%arg0: i32, %arg1: i32) -> (i32, i32) {
    %c0_i32 = arith.constant 0 : i32
    %c0_i32_0 = arith.constant 0 : i32
    return %arg0, %c0_i32 : i32, i32
  }
}

</mosaic_0001>

<llo_original>
// kernel: tpu_custom_call.1
$region0: #{tpu_custom_call.1}
  #allocation0 [shape = 'u32[]', space=smem, size = 0x4, offset = 0x4, fixed_abs, tag = 'smem constant byte address 0x4 - core index']
  #allocation1 [shape = 'u32[144,128]{1,0:T(1,128)}', space=vmem, size = 0x12000, scoped, tag = 'internal scratch']
  %s0 = inlined_call_operand.hbm [shape: f32[8,256], index: 0, kind: input, shape index: {}]
  %s1 = inlined_call_operand.hbm [shape: f32[8,256], index: 1, kind: input, shape index: {}]
  %s2 = inlined_call_operand.hbm [shape: f32[8,256], index: 2, kind: output, shape index: {}]
  %s3 = sld [smem:[#allocation0]]
  $region30: #{tpu_custom_call.1} parent=0
    _
  %s5 = ssub.s32 1, %s3
  %s6 = scalar_select 0, %s5, %s3
  $region1: #{tpu_custom_call.1} parent=0
    #allocation2 [shape = 'u8[8192]{0}', space=vmem, size = 0x2000, scoped, tag = 'input window, operand 0, single buffered']
    #allocation3 [shape = 's32[1]{0}', space=sflag, size = 0x4, scoped, tag = 'scoped memory for tpu_custom_call.1']
    #allocation4 [shape = 's32[1]{0}', space=sflag, size = 0x4, scoped, tag = 'scoped memory for tpu_custom_call.1']
    #allocation5 [shape = 'u8[8192]{0}', space=vmem, size = 0x2000, scoped, tag = 'input window, operand 1, single buffered']
    #allocation6 [shape = 's32[1]{0}', space=sflag, size = 0x4, scoped, tag = 'scoped memory for tpu_custom_call.1']
    #allocation7 [shape = 'u8[8192]{0}', space=vmem, size = 0x2000, scoped, tag = 'output window, operand 0, single buffered']
    %7 = vsyncpa [#allocation3], 0
    %8 = vsyncpa [#allocation6], 0
    %9 = vsyncpa [#allocation4], 0
    // Predicated region
    $region2: #{tpu_custom_call.1} parent=1 // pred_check
      _
    $region3: #{tpu_custom_call.1} parent=1 // pred_check_branch
      %11 = sbr.rel (0) target = $region5
    $region4: #{tpu_custom_call.1} parent=1 // pred_region
      %s12 = sadd.s32 0, 0
      %p13 = scmp.lt.s32.totalorder %s12, 0
      %s14 = scalar_select %p13, %s12, 0
      %s16 = ssub.s32 256, 256
      %17 = vsyncadd [#allocation3], %s16
      %s18 = smul.addr %s14, 2
      %s19 = smul.addr %s18, 128
      %s20 = scalar_lea.hbm %s0, %s19
      %s22 = sshll.u32 [#allocation2], 4
      %s23 = int_to_ptr.vmem [resolvable:$true] %s22
      %25 = dma.hbm_to_vmem [thread:$0]  %s20, 256, %s23, [#allocation3]
    $region5: #{tpu_custom_call.1} parent=1 // pred_fallthru
      _
    // Predicated region
    $region6: #{tpu_custom_call.1} parent=1 // pred_check
      _
    $region7: #{tpu_custom_call.1} parent=1 // pred_check_branch
      %27 = sbr.rel (0) target = $region9
    $region8: #{tpu_custom_call.1} parent=1 // pred_region
      %s28 = sadd.s32 0, 0
      %p29 = scmp.lt.s32.totalorder %s28, 0
      %s30 = scalar_select %p29, %s28, 0
      %s32 = ssub.s32 256, 256
      %33 = vsyncadd [#allocation6], %s32
      %s34 = smul.addr %s30, 2
      %s35 = smul.addr %s34, 128
      %s36 = scalar_lea.hbm %s1, %s35
      %s38 = sshll.u32 [#allocation5], 4
      %s39 = int_to_ptr.vmem [resolvable:$true] %s38
      %41 = dma.hbm_to_vmem [thread:$0]  %s36, 256, %s39, [#allocation6]
    $region9: #{tpu_custom_call.1} parent=1 // pred_fallthru
      _
    // Predicated region
    $region10: #{tpu_custom_call.1} parent=1 // pred_check
      _
    $region11: #{tpu_custom_call.1} parent=1 // pred_check_branch
      %43 = sbr.rel (0) target = $region13
    $region12: #{tpu_custom_call.1} parent=1 // pred_region
      %44 = dma.done [#allocation3], 256
    $region13: #{tpu_custom_call.1} parent=1 // pred_fallthru
      _
    // Predicated region
    $region14: #{tpu_custom_call.1} parent=1 // pred_check
      _
    $region15: #{tpu_custom_call.1} parent=1 // pred_check_branch
      %46 = sbr.rel (0) target = $region17
    $region16: #{tpu_custom_call.1} parent=1 // pred_region
      %47 = dma.done [#allocation6], 256
    $region17: #{tpu_custom_call.1} parent=1 // pred_fallthru
      _
    %s48 = sadd.s32 0, 0
    %p49 = scmp.lt.s32.totalorder %s48, 0
    %s50 = scalar_select %p49, %s48, 0
    %s51 = sadd.s32 0, 0
    %p52 = scmp.lt.s32.totalorder %s51, 0
    %s53 = scalar_select %p52, %s51, 0
    %p54 = scmp.eq.s32.totalorder 0, 0
    // Predicated region
    $region18: #{tpu_custom_call.1} parent=1 // pred_check
      %p55 = pneg %p54
    $region19: #{tpu_custom_call.1} parent=1 // pred_check_branch
      %57 = sbr.rel (%p55) target = $region21
    $region20: #{tpu_custom_call.1} parent=1 // pred_region
      %58 = vst [vmem:[#allocation7] sm:$0xff] 0.0
      %59 = vst [vmem:[#allocation7 + $0x8] sm:$0xff] 0.0
    $region21: #{tpu_custom_call.1} parent=1 // pred_fallthru
      _
    %s60 = sadd.s32 0, 0
    %s61 = smul.u32 %s60, 8
    %v62 = vlaneseq
    %v63 = vshrl.u32 %v62, 7
    %v64 = vstv %s61
    %v65 = vadd.s32 %v64, %v63
    %vm66 = vcmp.lt.s32.totalorder %v65, 8
    %v67 = vld [vmem:[#allocation2] sm:$0xff]
    %v68 = vld [vmem:[#allocation2 + $0x8] sm:$0xff]
    %v69 = vld [vmem:[#allocation5] sm:$0xff]
    %v70 = vld [vmem:[#allocation5 + $0x8] sm:$0xff]
    %v71 = vsel %vm66, %v67, -40.0
    %v72 = vsel %vm66, %v68, -40.0
    %v73 = vsel %vm66, %v69, 0.0
    %v74 = vsel %vm66, %v70, 0.0
    %v75 = vand.u32 2147483647, %v71
    %v76 = vand.u32 2147483647, %v72
    %v77 = vsub.f32 0.0, %v75
    %v78 = vsub.f32 0.0, %v76
    %v79 = vmul.f32 %v77, 1.442695
    %v80 = vpow.pop %v79
    %v81 = vmul.f32 %v78, 1.442695
    %v82 = vpow.pop %v81
    %v83 = vadd.f32 %v80, 1.0
    %v84 = vadd.f32 %v82, 1.0
    %v85 = vmax.f32 %v71, 0.0
    %v86 = vmax.f32 %v72, 0.0
    %v87 = vmul.f32 %v71, %v73
    %v88 = vmul.f32 %v72, %v74
    %v89 = vsub.f32 %v85, %v87
    %v90 = vsub.f32 %v86, %v88
    %v91 = vadd.f32 %v80, 1.0
    %v92 = vlog2.pop %v91
    %v93 = vmul.f32 %v92, 0.6931472
    %v94 = vmul.f32 -0.5, %v80
    %v95 = vadd.f32 %v94, 1.0
    %v96 = vmul.f32 %v95, %v80
    %v97 = vand.u32 2147483647, %v80
    %vm98 = vcmp.lt.f32.partialorder %v97, 0.0004427343
    %v99 = vsel %vm98, %v96, %v93
    %v100 = vadd.f32 %v82, 1.0
    %v101 = vlog2.pop %v100
    %v102 = vmul.f32 %v101, 0.6931472
    %v103 = vmul.f32 -0.5, %v82
    %v104 = vadd.f32 %v103, 1.0
    %v105 = vmul.f32 %v104, %v82
    %v106 = vand.u32 2147483647, %v82
    %vm107 = vcmp.lt.f32.partialorder %v106, 0.0004427343
    %v108 = vsel %vm107, %v105, %v102
    %v109 = vadd.f32 %v89, %v99
    %v110 = vadd.f32 %v90, %v108
    %v111 = vrcp.pop %v83
    %v112 = vrcp.pop %v84
    %v113 = vmul.f32 %v83, %v111
    %v114 = vmul.f32 %v84, %v112
    %v115 = vsub.f32 2.0, %v113
    %v116 = vsub.f32 2.0, %v114
    %v117 = vmul.f32 %v111, %v115
    %v118 = vmul.f32 %v112, %v116
    %vm119 = vcmp.ge.f32.partialorder %v71, 0.0
    %vm120 = vcmp.ge.f32.partialorder %v72, 0.0
    %v121 = vsel %vm119, 1.0, %v80
    %v122 = vsel %vm120, 1.0, %v82
    %v123 = vmul.f32 %v121, %v117
    %v124 = vmul.f32 %v122, %v118
    %v125 = vsub.f32 %v73, %v123
    %v126 = vsub.f32 %v74, %v124
    %v127 = vand.u32 2147483647, %v125
    %v128 = vand.u32 2147483647, %v126
    %v129 = vmul.f32 %v127, -20.0
    %v130 = vmul.f32 %v128, -20.0
    %v131 = vmul.f32 %v129, 1.442695
    %v132 = vpow.pop %v131
    %v133 = vmul.f32 %v130, 1.442695
    %v134 = vpow.pop %v133
    %v135 = vsub.f32 1.0, %v132
    %v136 = vsub.f32 1.0, %v134
    %v137 = vmul.f32 %v109, %v135
    %v138 = vmul.f32 %v110, %v136
    %v139 = vsel %vm66, %v137, 0.0
    %v140 = vsel %vm66, %v138, 0.0
    %v141 = vld [vmem:[#allocation7] sm:$0xff]
    %v142 = vld [vmem:[#allocation7 + $0x8] sm:$0xff]
    %v143 = vadd.f32 %v139, 0.0
    %v144 = vadd.f32 %v140, 0.0
    %v145 = vadd.f32 %v141, %v143
    %v146 = vadd.f32 %v142, %v144
    %147 = vst [vmem:[#allocation7] sm:$0xff] %v145
    %148 = vst [vmem:[#allocation7 + $0x8] sm:$0xff] %v146
    // Predicated region
    $region22: #{tpu_custom_call.1} parent=1 // pred_check
      _
    $region23: #{tpu_custom_call.1} parent=1 // pred_check_branch
      %150 = sbr.rel (0) target = $region25
    $region24: #{tpu_custom_call.1} parent=1 // pred_region
      %s152 = ssub.s32 256, 256
      %153 = vsyncadd [#allocation4], %s152
      %s155 = sshll.u32 [#allocation7], 4
      %s156 = int_to_ptr.vmem [resolvable:$true] %s155
      %158 = dma.vmem_to_hbm [thread:$0]  %s156, 256, %s2, [#allocation4]
    $region25: #{tpu_custom_call.1} parent=1 // pred_fallthru
      _
    // Predicated region
    $region26: #{tpu_custom_call.1} parent=1 // pred_check
      _
    $region27: #{tpu_custom_call.1} parent=1 // pred_check_branch
      %160 = sbr.rel (0) target = $region29
    $region28: #{tpu_custom_call.1} parent=1 // pred_region
      %161 = dma.done [#allocation4], 256
    $region29: #{tpu_custom_call.1} parent=1 // pred_fallthru
      _
    %162 = vsyncpa [#allocation3], 1
    %163 = vsyncpa [#allocation6], 1
    %164 = vsyncpa [#allocation4], 1

</llo_original>
